<compile_context>
chip_gen: v6e
topology: v6e:2x2x1
jax: 0.10.0
libtpu: 0.0.40
codegen_flags: <defaults>
</compile_context>

<pallas_src>
import math

import jax
import jax.numpy as jnp
from jax.experimental import pallas as pl
from jax.experimental.pallas import tpu as pltpu

NEGATIVE_SLOPE = 0.2
SCALE = math.sqrt(2.0)


def _scaled_leaky_relu_kernel(x_ref, o_ref):
    # Compute in f32 and match the module's op order exactly
    # (leaky_relu first, then * sqrt(2)); the extra multiply is free since the
    # kernel is HBM-bound on v5e/v6e/v7x.
    x = x_ref[...].astype(jnp.float32)
    y = jnp.where(x >= 0, x, x * NEGATIVE_SLOPE) * SCALE
    o_ref[...] = y.astype(o_ref.dtype)


def _cdiv(a, b):
    return -(-a // b)


def _round_up(a, b):
    return _cdiv(a, b) * b


def _num_tensorcores():
    """Best-effort TensorCore count (2 on v7x, 1 on v5e/v6e); safe fallback."""
    try:
        info = pltpu.get_tpu_info()
        for attr in ("num_cores", "core_count", "num_tensorcores",
                     "tensorcores_per_chip"):
            v = getattr(info, attr, None)
            if isinstance(v, int) and v > 0:
                return v
    except Exception:
        pass
    return 1


def scaled_leaky_relu(x, *, target_block_bytes=8 << 20):
    """leaky_relu(x, 0.2) * sqrt(2), elementwise, any shape/dtype."""
    orig_shape = x.shape
    total = x.size
    if total == 0:
        return x
    itemsize = jnp.dtype(x.dtype).itemsize
    sublane = max(8, 32 // itemsize)  # 8 for f32, 16 for bf16, 32 for int8/fp8

    # Adaptive lane width: prefer a C that divides the element count exactly so
    # the pad/slice fast path (pad == 0) is taken whenever possible.
    candidates = (1024, 512, 256, 128)
    C = None
    for c in candidates:
        if total % c == 0:
            C = c
            break
    if C is None:
        # Fallback: minimise the residual pad (< C elements); ties -> larger C.
        C = min(candidates, key=lambda c: (_round_up(total, c) - total, -c))

    rows = _cdiv(total, C)
    pad = rows * C - total

    # Largest sublane-aligned block under the per-block byte target.
    max_block_rows = max(
        sublane,
        ((target_block_bytes // (C * itemsize)) // sublane) * sublane,
    )
    block_rows = min(max_block_rows, _round_up(rows, sublane))
    block_rows = max(sublane, (block_rows // sublane) * sublane)

    # Grid: cdiv with a masked boundary block (no padding up to whole blocks).
    steps = _cdiv(rows, block_rows)

    # On multi-TC chips prefer an even (>= 2) step count so the "parallel"
    # axis load-balances across cores; inert on single-TC v5e/v6e.
    if _num_tensorcores() >= 2 and steps % 2 == 1 and rows > sublane:
        target_steps = steps + 1 if steps > 1 else 2
        cand = max(sublane, _round_up(_cdiv(rows, target_steps), sublane))
        if _cdiv(rows, cand) % 2 == 0:
            block_rows = cand
            steps = _cdiv(rows, cand)

    grid = (steps,)

    # Flatten; only pad when total is not a multiple of C (pad < C elements).
    x_flat = x.reshape(-1)
    if pad:
        x_flat = jnp.pad(x_flat, (0, pad))
    x2d = x_flat.reshape(rows, C)

    out2d = pl.pallas_call(
        _scaled_leaky_relu_kernel,
        out_shape=jax.ShapeDtypeStruct((rows, C), x.dtype),
        grid=grid,
        in_specs=[pl.BlockSpec((block_rows, C), lambda i: (i, 0))],
        out_specs=pl.BlockSpec((block_rows, C), lambda i: (i, 0)),
        compiler_params=pltpu.CompilerParams(
            dimension_semantics=("parallel",),
            # 4x block (in+out, double-buffered) = 32 MiB working set; 40 MiB
            # limit leaves headroom and stays under v7x's 64 MiB physical VMEM.
            vmem_limit_bytes=40 << 20,
        ),
        cost_estimate=pl.CostEstimate(
            flops=2 * total,
            transcendentals=0,
            bytes_accessed=2 * total * itemsize,
        ),
    )(x2d)

    out_flat = out2d.reshape(-1)
    if pad:
        out_flat = out_flat[:total]
    return out_flat.reshape(orig_shape)


def _reference(x):
    return jnp.where(x >= 0, x, x * NEGATIVE_SLOPE) * SCALE


if __name__ == "__main__":
    key = jax.random.PRNGKey(0)

    # Shape implied by the discriminator module: NCHW activations.
    x = jax.random.normal(key, (2, 4, 16, 16), dtype=jnp.float32)
    out = jax.block_until_ready(scaled_leaky_relu(x))
    assert out.shape == x.shape and out.dtype == x.dtype
    assert jnp.allclose(out, _reference(x), atol=1e-6, rtol=1e-6)

    # Awkward shape to exercise the (small) padding / remainder path.
    x2 = jax.random.normal(jax.random.PRNGKey(1), (3, 5, 7, 9), dtype=jnp.float32)
    out2 = jax.block_until_ready(scaled_leaky_relu(x2))
    assert out2.shape == x2.shape and out2.dtype == x2.dtype
    assert jnp.allclose(out2, _reference(x2), atol=1e-6, rtol=1e-6)

    # Larger, 128-divisible case hits the pad-free fast path with >1 grid step.
    x3 = jax.random.normal(jax.random.PRNGKey(2), (2, 64, 32, 32), dtype=jnp.bfloat16)
    out3 = jax.block_until_ready(scaled_leaky_relu(x3))
    assert out3.shape == x3.shape and out3.dtype == x3.dtype
    assert jnp.allclose(out3.astype(jnp.float32),
                        _reference(x3.astype(jnp.float32)), atol=2e-2, rtol=2e-2)

    print("KERNEL_OK")
</pallas_src>

<mosaic_0001>
module attributes {stable_mosaic.version = 11 : i64} {
  func.func @_scaled_leaky_relu_kernel(%arg0: i32, %arg1: memref<8x1024xf32, #tpu.memory_space<vmem>>, %arg2: memref<8x1024xf32, #tpu.memory_space<vmem>>) attributes {dimension_semantics = [#tpu.dimension_semantics<parallel>], iteration_bounds = array<i64: 1>, scalar_prefetch = 0 : i64, scratch_operands = 0 : i64, tpu.core_type = #tpu.core_type<tc>, window_params = [{transform_indices = @transform_0, window_bounds = array<i64: 8, 1024>}, {transform_indices = @transform_1, window_bounds = array<i64: 8, 1024>}]} {
    %c0 = arith.constant 0 : index
    %c0_0 = arith.constant 0 : index
    %0 = vector.load %arg1[%c0, %c0_0] : memref<8x1024xf32, #tpu.memory_space<vmem>>, vector<8x1024xf32>
    %cst = arith.constant 0.000000e+00 : f32
    %1 = vector.broadcast %cst : f32 to vector<8x1024xf32>
    %2 = arith.cmpf oge, %0, %1 : vector<8x1024xf32>
    %cst_1 = arith.constant 2.000000e-01 : f32
    %3 = vector.broadcast %cst_1 : f32 to vector<8x1024xf32>
    %4 = arith.mulf %0, %3 : vector<8x1024xf32>
    %5 = arith.select %2, %0, %4 : vector<8x1024xi1>, vector<8x1024xf32>
    %cst_2 = arith.constant 1.41421354 : f32
    %6 = vector.broadcast %cst_2 : f32 to vector<8x1024xf32>
    %7 = arith.mulf %5, %6 : vector<8x1024xf32>
    %c0_3 = arith.constant 0 : index
    %c0_4 = arith.constant 0 : index
    %8 = vector.load %arg2[%c0_3, %c0_4] : memref<8x1024xf32, #tpu.memory_space<vmem>>, vector<8x1024xf32>
    tpu.vector_store %arg2[%c0_3, %c0_4], %7 {strides = array<i32>} : memref<8x1024xf32, #tpu.memory_space<vmem>>, vector<8x1024xf32>,
    return
  }
  func.func @transform_0(%arg0: i32) -> (i32, i32) {
    %c0_i32 = arith.constant 0 : i32
    %c0_i32_0 = arith.constant 0 : i32
    return %arg0, %c0_i32 : i32, i32
  }
  func.func @transform_1(%arg0: i32) -> (i32, i32) {
    %c0_i32 = arith.constant 0 : i32
    %c0_i32_0 = arith.constant 0 : i32
    return %arg0, %c0_i32 : i32, i32
  }
}

</mosaic_0001>

<llo_original>
// kernel: tpu_custom_call.1
$region0: #{tpu_custom_call.1}
  #allocation0 [shape = 'u32[]', space=smem, size = 0x4, offset = 0x4, fixed_abs, tag = 'smem constant byte address 0x4 - core index']
  #allocation1 [shape = 'u32[144,128]{1,0:T(1,128)}', space=vmem, size = 0x12000, scoped, tag = 'internal scratch']
  %s0 = inlined_call_operand.hbm [shape: f32[2,1024], index: 0, kind: input, shape index: {}]
  %s1 = inlined_call_operand.hbm [shape: f32[2,1024], index: 1, kind: output, shape index: {}]
  %s2 = sld [smem:[#allocation0]]
  $region18: #{tpu_custom_call.1} parent=0
    _
  %s4 = ssub.s32 1, %s2
  %s5 = scalar_select 0, %s4, %s2
  $region1: #{tpu_custom_call.1} parent=0
    #allocation2 [shape = 'u8[32768]{0}', space=vmem, size = 0x8000, scoped, tag = 'input window, operand 0, single buffered']
    #allocation3 [shape = 's32[1]{0}', space=sflag, size = 0x4, scoped, tag = 'scoped memory for tpu_custom_call.1']
    #allocation4 [shape = 's32[1]{0}', space=sflag, size = 0x4, scoped, tag = 'scoped memory for tpu_custom_call.1']
    #allocation5 [shape = 'u8[32768]{0}', space=vmem, size = 0x8000, scoped, tag = 'output window, operand 0, single buffered']
    %6 = vsyncpa [#allocation3], 0
    %7 = vsyncpa [#allocation4], 0
    // Predicated region
    $region2: #{tpu_custom_call.1} parent=1 // pred_check
      _
    $region3: #{tpu_custom_call.1} parent=1 // pred_check_branch
      %9 = sbr.rel (0) target = $region5
    $region4: #{tpu_custom_call.1} parent=1 // pred_region
      %s11 = ssub.s32 1024, 256
      %12 = vsyncadd [#allocation3], %s11
      %s13 = sshll.u32 [#allocation2], 4
      %s14 = int_to_ptr.vmem [resolvable:$true] %s13
      %19 = dma.hbm_to_vmem [thread:$0]  %s0, 256, %s14, [#allocation3], 256, 256, 16
    $region5: #{tpu_custom_call.1} parent=1 // pred_fallthru
      _
    // Predicated region
    $region6: #{tpu_custom_call.1} parent=1 // pred_check
      _
    $region7: #{tpu_custom_call.1} parent=1 // pred_check_branch
      %21 = sbr.rel (0) target = $region9
    $region8: #{tpu_custom_call.1} parent=1 // pred_region
      %22 = dma.done [#allocation3], 1024
    $region9: #{tpu_custom_call.1} parent=1 // pred_fallthru
      _
    %v23 = vld [vmem:[#allocation2] sm:$0xff]
    %v24 = vld [vmem:[#allocation2 + $0x8] sm:$0xff]
    %v25 = vld [vmem:[#allocation2 + $0x10] sm:$0xff]
    %v26 = vld [vmem:[#allocation2 + $0x18] sm:$0xff]
    %v27 = vld [vmem:[#allocation2 + $0x20] sm:$0xff]
    %v28 = vld [vmem:[#allocation2 + $0x28] sm:$0xff]
    %v29 = vld [vmem:[#allocation2 + $0x30] sm:$0xff]
    %v30 = vld [vmem:[#allocation2 + $0x38] sm:$0xff]
    %vm31 = vcmp.ge.f32.partialorder %v23, 0.0
    %vm32 = vcmp.ge.f32.partialorder %v24, 0.0
    %vm33 = vcmp.ge.f32.partialorder %v25, 0.0
    %vm34 = vcmp.ge.f32.partialorder %v26, 0.0
    %vm35 = vcmp.ge.f32.partialorder %v27, 0.0
    %vm36 = vcmp.ge.f32.partialorder %v28, 0.0
    %vm37 = vcmp.ge.f32.partialorder %v29, 0.0
    %vm38 = vcmp.ge.f32.partialorder %v30, 0.0
    %v39 = vmul.f32 %v23, 0.2
    %v40 = vmul.f32 %v24, 0.2
    %v41 = vmul.f32 %v25, 0.2
    %v42 = vmul.f32 %v26, 0.2
    %v43 = vmul.f32 %v27, 0.2
    %v44 = vmul.f32 %v28, 0.2
    %v45 = vmul.f32 %v29, 0.2
    %v46 = vmul.f32 %v30, 0.2
    %v47 = vsel %vm31, %v23, %v39
    %v48 = vsel %vm32, %v24, %v40
    %v49 = vsel %vm33, %v25, %v41
    %v50 = vsel %vm34, %v26, %v42
    %v51 = vsel %vm35, %v27, %v43
    %v52 = vsel %vm36, %v28, %v44
    %v53 = vsel %vm37, %v29, %v45
    %v54 = vsel %vm38, %v30, %v46
    %v55 = vmul.f32 %v47, 1.4142135
    %v56 = vmul.f32 %v48, 1.4142135
    %v57 = vmul.f32 %v49, 1.4142135
    %v58 = vmul.f32 %v50, 1.4142135
    %v59 = vmul.f32 %v51, 1.4142135
    %v60 = vmul.f32 %v52, 1.4142135
    %v61 = vmul.f32 %v53, 1.4142135
    %v62 = vmul.f32 %v54, 1.4142135
    %63 = vst [vmem:[#allocation5] sm:$0xff] %v55
    %64 = vst [vmem:[#allocation5 + $0x8] sm:$0xff] %v56
    %65 = vst [vmem:[#allocation5 + $0x10] sm:$0xff] %v57
    %66 = vst [vmem:[#allocation5 + $0x18] sm:$0xff] %v58
    %67 = vst [vmem:[#allocation5 + $0x20] sm:$0xff] %v59
    %68 = vst [vmem:[#allocation5 + $0x28] sm:$0xff] %v60
    %69 = vst [vmem:[#allocation5 + $0x30] sm:$0xff] %v61
    %70 = vst [vmem:[#allocation5 + $0x38] sm:$0xff] %v62
    // Predicated region
    $region10: #{tpu_custom_call.1} parent=1 // pred_check
      _
    $region11: #{tpu_custom_call.1} parent=1 // pred_check_branch
      %72 = sbr.rel (0) target = $region13
    $region12: #{tpu_custom_call.1} parent=1 // pred_region
      %s74 = ssub.s32 1024, 256
      %75 = vsyncadd [#allocation4], %s74
      %s76 = sshll.u32 [#allocation5], 4
      %s77 = int_to_ptr.vmem [resolvable:$true] %s76
      %82 = dma.vmem_to_hbm [thread:$0]  %s77, 256, %s1, [#allocation4], 256, 256, 16
    $region13: #{tpu_custom_call.1} parent=1 // pred_fallthru
      _
    // Predicated region
    $region14: #{tpu_custom_call.1} parent=1 // pred_check
      _
    $region15: #{tpu_custom_call.1} parent=1 // pred_check_branch
      %84 = sbr.rel (0) target = $region17
    $region16: #{tpu_custom_call.1} parent=1 // pred_region
      %85 = dma.done [#allocation4], 1024
    $region17: #{tpu_custom_call.1} parent=1 // pred_fallthru
      _
    %86 = vsyncpa [#allocation3], 1
    %87 = vsyncpa [#allocation4], 1

</llo_original>
